<compile_context>
chip_gen: v7x
topology: tpu7x:2x2x1
jax: 0.10.0
libtpu: 0.0.40
codegen_flags: <defaults>
</compile_context>

<pallas_src>
import functools

import jax
import jax.numpy as jnp
from jax.experimental import pallas as pl
from jax.experimental.pallas import tpu as pltpu


def _round_up(x, m):
    return ((x + m - 1) // m) * m


def _dag_kernel(xa_ref, xb_ref,
                waT_ref, wbT_ref, bab_ref,
                wmT_ref, bm_ref,
                w12T_ref, b12_ref,
                o1_ref, o2_ref,
                *, c_out):
    # Input ops (two 1x1 convs) + merge='add' + fused bias (ba + bb).
    # All matmuls have pixels on the lane axis -> MXU with f32 accumulation.
    feat = (jnp.dot(waT_ref[...], xa_ref[...], preferred_element_type=jnp.float32)
            + jnp.dot(wbT_ref[...], xb_ref[...], preferred_element_type=jnp.float32)
            + bab_ref[...])
    # post_input: ReLU (in f32)
    feat = jnp.maximum(feat, 0.0)
    # middle: 1x1 conv + ReLU
    mid = jnp.dot(wmT_ref[...], feat, preferred_element_type=jnp.float32) + bm_ref[...]
    mid = jnp.maximum(mid, 0.0)
    # output ops: the two 1x1 convs fused into one (2*C_out, C_mid) matmul,
    # split along the sublane axis into the two lane-dense output tiles.
    o = jnp.dot(w12T_ref[...], mid, preferred_element_type=jnp.float32) + b12_ref[...]
    o1_ref[...] = o[:c_out, :].astype(o1_ref.dtype)
    o2_ref[...] = o[c_out:, :].astype(o2_ref.dtype)


def dag_block_pallas(feature_dict, params, *, tile_px=2048, interpret=False):
    """feature_dict: {'a': NCHW, 'b': NCHW}.  Returns dict with 'out1','out2' added."""
    xa_nchw = feature_dict["a"]
    xb_nchw = feature_dict["b"]
    B, C_in, H, W = xa_nchw.shape
    HW = H * W

    # NCHW -> (B, C, H*W): pure reshape (H, W are the trailing dims), no
    # transpose and no extra HBM traffic.
    xa = xa_nchw.reshape(B, C_in, HW)
    xb = xb_nchw.reshape(B, C_in, HW)

    (wa, ba), (wb, bb), (wm, bm), (w1, b1), (w2, b2) = (
        params["a"], params["b"], params["mid"], params["out1"], params["out2"])
    C_mid = wa.shape[1]
    C_out = w1.shape[1]

    # Pixel tiling: lane axis = pixels.  Tiles are multiples of 128 lanes and
    # the pixel axis is padded up to a whole number of tiles (padded pixels are
    # discarded in the wrapper).
    tile_px = min(tile_px, _round_up(HW, 128))
    HW_pad = _round_up(HW, tile_px)
    if HW_pad != HW:
        pad = [(0, 0), (0, 0), (0, HW_pad - HW)]
        xa = jnp.pad(xa, pad)
        xb = jnp.pad(xb, pad)

    # Weight prep (tiny arrays): pre-transpose so the kernel computes W^T @ X,
    # pre-sum the merged input biases, and fuse the two output convs.
    waT = wa.T                                       # (C_mid, C_in)
    wbT = wb.T                                       # (C_mid, C_in)
    bab = (ba + bb).reshape(C_mid, 1)                # (C_mid, 1)
    wmT = wm.T                                       # (C_mid, C_mid)
    bmT = bm.reshape(C_mid, 1)                       # (C_mid, 1)
    w12T = jnp.concatenate([w1, w2], axis=1).T       # (2*C_out, C_mid)
    b12 = jnp.concatenate([b1, b2], axis=1).reshape(2 * C_out, 1)

    grid = (B, HW_pad // tile_px)

    x_spec = pl.BlockSpec((None, C_in, tile_px), lambda b, j: (b, 0, j))
    o_spec = pl.BlockSpec((None, C_out, tile_px), lambda b, j: (b, 0, j))

    def full_spec(shape):
        return pl.BlockSpec(shape, lambda b, j: (0,) * len(shape))

    out_shapes = (jax.ShapeDtypeStruct((B, C_out, HW_pad), xa.dtype),
                  jax.ShapeDtypeStruct((B, C_out, HW_pad), xa.dtype))

    itemsize = jnp.dtype(xa.dtype).itemsize
    cost = pl.CostEstimate(
        flops=2 * B * HW_pad * C_mid * (2 * C_in + C_mid + 2 * C_out),
        transcendentals=0,
        bytes_accessed=B * HW_pad * (2 * C_in + 2 * C_out) * itemsize)

    o1, o2 = pl.pallas_call(
        functools.partial(_dag_kernel, c_out=C_out),
        out_shape=out_shapes,
        grid=grid,
        in_specs=[
            x_spec, x_spec,
            full_spec(waT.shape), full_spec(wbT.shape), full_spec(bab.shape),
            full_spec(wmT.shape), full_spec(bmT.shape),
            full_spec(w12T.shape), full_spec(b12.shape),
        ],
        out_specs=(o_spec, o_spec),
        compiler_params=pltpu.CompilerParams(
            dimension_semantics=("parallel", "parallel")),
        cost_estimate=cost,
        interpret=interpret,
    )(xa, xb, waT, wbT, bab, wmT, bmT, w12T, b12)

    # (B, C_out, HW_pad) -> NCHW (drop pixel padding; pure reshape otherwise).
    def to_nchw(x):
        return x[:, :, :HW].reshape(B, C_out, H, W)

    out_dict = dict(feature_dict)
    out_dict["out1"] = to_nchw(o1)
    out_dict["out2"] = to_nchw(o2)
    return out_dict


def _reference(feature_dict, params):
    """Pure-JAX reference of the same DAGBlock forward (NCHW 1x1 convs)."""
    def conv1x1(x_nchw, w, b):  # w: (Cin, Cout), b: (1, Cout)
        y = jnp.einsum("bchw,cd->bdhw", x_nchw, w)
        return y + b.reshape(1, -1, 1, 1)

    (wa, ba), (wb, bb), (wm, bm), (w1, b1), (w2, b2) = (
        params["a"], params["b"], params["mid"], params["out1"], params["out2"])
    feat = conv1x1(feature_dict["a"], wa, ba) + conv1x1(feature_dict["b"], wb, bb)
    feat = jnp.maximum(feat, 0.0)                     # post_input ReLU
    mid = jnp.maximum(conv1x1(feat, wm, bm), 0.0)     # middle conv + ReLU
    out = dict(feature_dict)
    out["out1"] = conv1x1(mid, w1, b1)
    out["out2"] = conv1x1(mid, w2, b2)
    return out


def _init_params(key, c_in, c_mid, c_out, dtype=jnp.float32):
    ks = jax.random.split(key, 10)

    def lin(kw, kb, ci, co):
        w = (jax.random.normal(kw, (ci, co), dtype) * 0.1).astype(dtype)
        b = (jax.random.normal(kb, (1, co), dtype) * 0.1).astype(dtype)
        return w, b

    return {
        "a": lin(ks[0], ks[1], c_in, c_mid),
        "b": lin(ks[2], ks[3], c_in, c_mid),
        "mid": lin(ks[4], ks[5], c_mid, c_mid),
        "out1": lin(ks[6], ks[7], c_mid, c_out),
        "out2": lin(ks[8], ks[9], c_mid, c_out),
    }


if __name__ == "__main__":
    key = jax.random.PRNGKey(0)
    k_a, k_b, k_p = jax.random.split(key, 3)

    B, C_in, H, W = 2, 4, 16, 16
    C_mid, C_out = 32, 8

    feature_dict = {
        "a": jax.random.normal(k_a, (B, C_in, H, W), jnp.float32),
        "b": jax.random.normal(k_b, (B, C_in, H, W), jnp.float32),
    }
    params = _init_params(k_p, C_in, C_mid, C_out)

    out = dag_block_pallas(feature_dict, params)
    out = jax.tree_util.tree_map(jax.block_until_ready, out)

    ref = _reference(feature_dict, params)
    assert jnp.allclose(out["out1"], ref["out1"], atol=1e-5, rtol=1e-5)
    assert jnp.allclose(out["out2"], ref["out2"], atol=1e-5, rtol=1e-5)
    # passthrough keys preserved, as in the PyTorch module (dict is updated in place)
    assert set(out.keys()) == {"a", "b", "out1", "out2"}

    print("KERNEL_OK")
</pallas_src>

<mosaic_0001>
module attributes {stable_mosaic.version = 11 : i64} {
  func.func @_dag_kernel(%arg0: i32, %arg1: i32, %arg2: memref<1x4x256xf32, #tpu.memory_space<vmem>>, %arg3: memref<1x4x256xf32, #tpu.memory_space<vmem>>, %arg4: memref<32x4xf32, #tpu.memory_space<vmem>>, %arg5: memref<32x4xf32, #tpu.memory_space<vmem>>, %arg6: memref<32x1xf32, #tpu.memory_space<vmem>>, %arg7: memref<32x32xf32, #tpu.memory_space<vmem>>, %arg8: memref<32x1xf32, #tpu.memory_space<vmem>>, %arg9: memref<16x32xf32, #tpu.memory_space<vmem>>, %arg10: memref<16x1xf32, #tpu.memory_space<vmem>>, %arg11: memref<1x8x256xf32, #tpu.memory_space<vmem>>, %arg12: memref<1x8x256xf32, #tpu.memory_space<vmem>>) attributes {dimension_semantics = [#tpu.dimension_semantics<parallel>, #tpu.dimension_semantics<parallel>], iteration_bounds = array<i64: 2, 1>, scalar_prefetch = 0 : i64, scratch_operands = 0 : i64, tpu.core_type = #tpu.core_type<tc>, window_params = [{transform_indices = @transform_0, window_bounds = array<i64: 1, 4, 256>}, {transform_indices = @transform_1, window_bounds = array<i64: 1, 4, 256>}, {pipeline_mode = #tpu.pipeline_mode<synchronous>, transform_indices = @transform_2, window_bounds = array<i64: 32, 4>}, {pipeline_mode = #tpu.pipeline_mode<synchronous>, transform_indices = @transform_3, window_bounds = array<i64: 32, 4>}, {pipeline_mode = #tpu.pipeline_mode<synchronous>, transform_indices = @transform_4, window_bounds = array<i64: 32, 1>}, {pipeline_mode = #tpu.pipeline_mode<synchronous>, transform_indices = @transform_5, window_bounds = array<i64: 32, 32>}, {pipeline_mode = #tpu.pipeline_mode<synchronous>, transform_indices = @transform_6, window_bounds = array<i64: 32, 1>}, {pipeline_mode = #tpu.pipeline_mode<synchronous>, transform_indices = @transform_7, window_bounds = array<i64: 16, 32>}, {pipeline_mode = #tpu.pipeline_mode<synchronous>, transform_indices = @transform_8, window_bounds = array<i64: 16, 1>}, {transform_indices = @transform_9, window_bounds = array<i64: 1, 8, 256>}, {transform_indices = @transform_10, window_bounds = array<i64: 1, 8, 256>}]} {
    %c0 = arith.constant 0 : index
    %c0_0 = arith.constant 0 : index
    %0 = vector.load %arg4[%c0, %c0_0] : memref<32x4xf32, #tpu.memory_space<vmem>>, vector<32x4xf32>
    %c0_1 = arith.constant 0 : index
    %c0_2 = arith.constant 0 : index
    %c0_3 = arith.constant 0 : index
    %1 = vector.load %arg2[%c0_1, %c0_2, %c0_3] : memref<1x4x256xf32, #tpu.memory_space<vmem>>, vector<1x4x256xf32>
    %2 = vector.shape_cast %1 : vector<1x4x256xf32> to vector<4x256xf32>
    %cst = arith.constant dense<0.000000e+00> : vector<32x256xf32>
    %3 = tpu.matmul %0, %2, %cst {dimension_numbers = #tpu.dot_dimension_numbers<[1], [0], [0], [1], [0, 0, 1, 1], [], []>} : vector<32x4xf32>, vector<4x256xf32>, vector<32x256xf32> -> vector<32x256xf32>
    %c0_4 = arith.constant 0 : index
    %c0_5 = arith.constant 0 : index
    %4 = vector.load %arg5[%c0_4, %c0_5] : memref<32x4xf32, #tpu.memory_space<vmem>>, vector<32x4xf32>
    %c0_6 = arith.constant 0 : index
    %c0_7 = arith.constant 0 : index
    %c0_8 = arith.constant 0 : index
    %5 = vector.load %arg3[%c0_6, %c0_7, %c0_8] : memref<1x4x256xf32, #tpu.memory_space<vmem>>, vector<1x4x256xf32>
    %6 = vector.shape_cast %5 : vector<1x4x256xf32> to vector<4x256xf32>
    %cst_9 = arith.constant dense<0.000000e+00> : vector<32x256xf32>
    %7 = tpu.matmul %4, %6, %cst_9 {dimension_numbers = #tpu.dot_dimension_numbers<[1], [0], [0], [1], [0, 0, 1, 1], [], []>} : vector<32x4xf32>, vector<4x256xf32>, vector<32x256xf32> -> vector<32x256xf32>
    %8 = arith.addf %3, %7 : vector<32x256xf32>
    %c0_10 = arith.constant 0 : index
    %c0_11 = arith.constant 0 : index
    %9 = vector.load %arg6[%c0_10, %c0_11] : memref<32x1xf32, #tpu.memory_space<vmem>>, vector<32x1xf32>
    %10 = vector.broadcast %9 : vector<32x1xf32> to vector<32x256xf32>
    %11 = arith.addf %8, %10 : vector<32x256xf32>
    %cst_12 = arith.constant 0.000000e+00 : f32
    %12 = vector.broadcast %cst_12 : f32 to vector<32x256xf32>
    %13 = arith.maximumf %11, %12 : vector<32x256xf32>
    %c0_13 = arith.constant 0 : index
    %c0_14 = arith.constant 0 : index
    %14 = vector.load %arg7[%c0_13, %c0_14] : memref<32x32xf32, #tpu.memory_space<vmem>>, vector<32x32xf32>
    %cst_15 = arith.constant dense<0.000000e+00> : vector<32x256xf32>
    %15 = tpu.matmul %14, %13, %cst_15 {dimension_numbers = #tpu.dot_dimension_numbers<[1], [0], [0], [1], [0, 0, 1, 1], [], []>} : vector<32x32xf32>, vector<32x256xf32>, vector<32x256xf32> -> vector<32x256xf32>
    %c0_16 = arith.constant 0 : index
    %c0_17 = arith.constant 0 : index
    %16 = vector.load %arg8[%c0_16, %c0_17] : memref<32x1xf32, #tpu.memory_space<vmem>>, vector<32x1xf32>
    %17 = vector.broadcast %16 : vector<32x1xf32> to vector<32x256xf32>
    %18 = arith.addf %15, %17 : vector<32x256xf32>
    %cst_18 = arith.constant 0.000000e+00 : f32
    %19 = vector.broadcast %cst_18 : f32 to vector<32x256xf32>
    %20 = arith.maximumf %18, %19 : vector<32x256xf32>
    %c0_19 = arith.constant 0 : index
    %c0_20 = arith.constant 0 : index
    %21 = vector.load %arg9[%c0_19, %c0_20] : memref<16x32xf32, #tpu.memory_space<vmem>>, vector<16x32xf32>
    %cst_21 = arith.constant dense<0.000000e+00> : vector<16x256xf32>
    %22 = tpu.matmul %21, %20, %cst_21 {dimension_numbers = #tpu.dot_dimension_numbers<[1], [0], [0], [1], [0, 0, 1, 1], [], []>} : vector<16x32xf32>, vector<32x256xf32>, vector<16x256xf32> -> vector<16x256xf32>
    %c0_22 = arith.constant 0 : index
    %c0_23 = arith.constant 0 : index
    %23 = vector.load %arg10[%c0_22, %c0_23] : memref<16x1xf32, #tpu.memory_space<vmem>>, vector<16x1xf32>
    %24 = vector.broadcast %23 : vector<16x1xf32> to vector<16x256xf32>
    %25 = arith.addf %22, %24 : vector<16x256xf32>
    %26 = vector.extract_strided_slice %25 {offsets = [0, 0], sizes = [8, 256], strides = [1, 1]} : vector<16x256xf32> to vector<8x256xf32>
    %c0_24 = arith.constant 0 : index
    %c0_25 = arith.constant 0 : index
    %c0_26 = arith.constant 0 : index
    %27 = vector.load %arg11[%c0_24, %c0_25, %c0_26] : memref<1x8x256xf32, #tpu.memory_space<vmem>>, vector<1x8x256xf32>
    %28 = vector.shape_cast %27 : vector<1x8x256xf32> to vector<8x256xf32>
    %29 = vector.shape_cast %26 : vector<8x256xf32> to vector<1x8x256xf32>
    tpu.vector_store %arg11[%c0_24, %c0_25, %c0_26], %29 {strides = array<i32>} : memref<1x8x256xf32, #tpu.memory_space<vmem>>, vector<1x8x256xf32>,
    %30 = vector.extract_strided_slice %25 {offsets = [8, 0], sizes = [8, 256], strides = [1, 1]} : vector<16x256xf32> to vector<8x256xf32>
    %c0_27 = arith.constant 0 : index
    %c0_28 = arith.constant 0 : index
    %c0_29 = arith.constant 0 : index
    %31 = vector.load %arg12[%c0_27, %c0_28, %c0_29] : memref<1x8x256xf32, #tpu.memory_space<vmem>>, vector<1x8x256xf32>
    %32 = vector.shape_cast %31 : vector<1x8x256xf32> to vector<8x256xf32>
    %33 = vector.shape_cast %30 : vector<8x256xf32> to vector<1x8x256xf32>
    tpu.vector_store %arg12[%c0_27, %c0_28, %c0_29], %33 {strides = array<i32>} : memref<1x8x256xf32, #tpu.memory_space<vmem>>, vector<1x8x256xf32>,
    return
  }
  func.func @transform_0(%arg0: i32, %arg1: i32) -> (i32, i32, i32) {
    %c0_i32 = arith.constant 0 : i32
    %c0_i32_0 = arith.constant 0 : i32
    return %arg0, %c0_i32, %arg1 : i32, i32, i32
  }
  func.func @transform_1(%arg0: i32, %arg1: i32) -> (i32, i32, i32) {
    %c0_i32 = arith.constant 0 : i32
    %c0_i32_0 = arith.constant 0 : i32
    return %arg0, %c0_i32, %arg1 : i32, i32, i32
  }
  func.func @transform_2(%arg0: i32, %arg1: i32) -> (i32, i32) {
    %c0_i32 = arith.constant 0 : i32
    %c0_i32_0 = arith.constant 0 : i32
    %c0_i32_1 = arith.constant 0 : i32
    return %c0_i32, %c0_i32_0 : i32, i32
  }
  func.func @transform_3(%arg0: i32, %arg1: i32) -> (i32, i32) {
    %c0_i32 = arith.constant 0 : i32
    %c0_i32_0 = arith.constant 0 : i32
    %c0_i32_1 = arith.constant 0 : i32
    return %c0_i32, %c0_i32_0 : i32, i32
  }
  func.func @transform_4(%arg0: i32, %arg1: i32) -> (i32, i32) {
    %c0_i32 = arith.constant 0 : i32
    %c0_i32_0 = arith.constant 0 : i32
    %c0_i32_1 = arith.constant 0 : i32
    return %c0_i32, %c0_i32_0 : i32, i32
  }
  func.func @transform_5(%arg0: i32, %arg1: i32) -> (i32, i32) {
    %c0_i32 = arith.constant 0 : i32
    %c0_i32_0 = arith.constant 0 : i32
    %c0_i32_1 = arith.constant 0 : i32
    return %c0_i32, %c0_i32_0 : i32, i32
  }
  func.func @transform_6(%arg0: i32, %arg1: i32) -> (i32, i32) {
    %c0_i32 = arith.constant 0 : i32
    %c0_i32_0 = arith.constant 0 : i32
    %c0_i32_1 = arith.constant 0 : i32
    return %c0_i32, %c0_i32_0 : i32, i32
  }
  func.func @transform_7(%arg0: i32, %arg1: i32) -> (i32, i32) {
    %c0_i32 = arith.constant 0 : i32
    %c0_i32_0 = arith.constant 0 : i32
    %c0_i32_1 = arith.constant 0 : i32
    return %c0_i32, %c0_i32_0 : i32, i32
  }
  func.func @transform_8(%arg0: i32, %arg1: i32) -> (i32, i32) {
    %c0_i32 = arith.constant 0 : i32
    %c0_i32_0 = arith.constant 0 : i32
    %c0_i32_1 = arith.constant 0 : i32
    return %c0_i32, %c0_i32_0 : i32, i32
  }
  func.func @transform_9(%arg0: i32, %arg1: i32) -> (i32, i32, i32) {
    %c0_i32 = arith.constant 0 : i32
    %c0_i32_0 = arith.constant 0 : i32
    return %arg0, %c0_i32, %arg1 : i32, i32, i32
  }
  func.func @transform_10(%arg0: i32, %arg1: i32) -> (i32, i32, i32) {
    %c0_i32 = arith.constant 0 : i32
    %c0_i32_0 = arith.constant 0 : i32
    return %arg0, %c0_i32, %arg1 : i32, i32, i32
  }
}

</mosaic_0001>

<llo_original>
// kernel: tpu_custom_call.1
$region0: #{tpu_custom_call.1}
  #allocation0 [shape = 'u32[]', space=smem, size = 0x4, offset = 0x4, fixed_abs, tag = 'smem constant byte address 0x4 - core index']
  #allocation1 [shape = 'u32[144,128]{1,0:T(1,128)}', space=vmem, size = 0x12000, scoped, tag = 'internal scratch']
  %s0 = inlined_call_operand.vmem [shape: f32[2,4,256], index: 0, kind: input, shape index: {}]
  %s1 = inlined_call_operand.vmem [shape: f32[2,4,256], index: 1, kind: input, shape index: {}]
  %s2 = inlined_call_operand.vmem [shape: f32[32,4], index: 2, kind: input, shape index: {}]
  %s3 = inlined_call_operand.vmem [shape: f32[32,4], index: 3, kind: input, shape index: {}]
  %s4 = inlined_call_operand.vmem [shape: f32[32,1], index: 4, kind: input, shape index: {}]
  %s5 = inlined_call_operand.vmem [shape: f32[32,32], index: 5, kind: input, shape index: {}]
  %s6 = inlined_call_operand.vmem [shape: f32[32,1], index: 6, kind: input, shape index: {}]
  %s7 = inlined_call_operand.vmem [shape: f32[16,32], index: 7, kind: input, shape index: {}]
  %s8 = inlined_call_operand.vmem [shape: f32[16,1], index: 8, kind: input, shape index: {}]
  %s9 = inlined_call_operand.hbm [shape: f32[2,8,256], index: 9, kind: output, shape index: {0}]
  %s10 = inlined_call_operand.hbm [shape: f32[2,8,256], index: 10, kind: output, shape index: {1}]
  %11 = xla_tuple %s9, %s10
  %s12 = sld [smem:[#allocation0]]
  $region77: #{tpu_custom_call.1} parent=0
    _
  %s14 = ssub.s32 1, %s12
  %s15 = scalar_select 0, %s14, %s12
  $region1: #{tpu_custom_call.1} parent=0
    #allocation2 [shape = 'u8[16384]{0}', space=vmem, size = 0x4000, scoped, tag = 'output window, operand 0']
    #allocation3 [shape = 's32[2]{0}', space=sflag, size = 0x8, scoped, tag = 'scoped memory for tpu_custom_call.1']
    #allocation4 [shape = 'u8[16384]{0}', space=vmem, size = 0x4000, scoped, tag = 'output window, operand 1']
    #allocation5 [shape = 's32[2]{0}', space=sflag, size = 0x8, scoped, tag = 'scoped memory for tpu_custom_call.1']
    %16 = vsyncpa [#allocation3], 0
    %s17 = scalar_lea.sflag [#allocation3], 1
    %18 = vsyncpa %s17, 0
    %19 = vsyncpa [#allocation5], 0
    %s20 = scalar_lea.sflag [#allocation5], 1
    %21 = vsyncpa %s20, 0
    loop: start=0, step=1, limit=4
    $region2: #{tpu_custom_call.1} parent=1 // loop_pre_header
      _
    $region3: #{tpu_custom_call.1} parent=1 // loop_header
      %s23 = sphi 0, %s27
      %p24 = scmp.ge.s32.totalorder %s23, 4
      %s30 = sphi 0, %s42
      %s31 = sphi 0, %s38
      %s32 = sphi 0, %s30
      %s33 = sphi 0, %s31
      %s34 = sphi 0, %s32
      %s35 = sphi 0, %s33
      %s47 = sphi 0, %s49
      %s50 = sphi 0, %s47
      %s51 = sphi 0, %s50
      %s67 = sphi 0, %s51
      %s75 = sphi 0, %s77
      %s78 = sphi 0, %s75
      %s79 = sphi 0, %s78
      %s95 = sphi 0, %s79
      %s99 = sphi 0, %s99
      %s101 = sphi 0, %s99
      %s102 = sphi 0, %s101
      %s116 = sphi 0, %s102
      %s120 = sphi 0, %s120
      %s122 = sphi 0, %s120
      %s123 = sphi 0, %s122
      %s137 = sphi 0, %s123
      %s141 = sphi 0, %s141
      %s143 = sphi 0, %s141
      %s144 = sphi 0, %s143
      %s158 = sphi 0, %s144
      %s162 = sphi 0, %s162
      %s164 = sphi 0, %s162
      %s165 = sphi 0, %s164
      %s179 = sphi 0, %s165
      %s183 = sphi 0, %s183
      %s185 = sphi 0, %s183
      %s186 = sphi 0, %s185
      %s200 = sphi 0, %s186
      %s204 = sphi 0, %s204
      %s206 = sphi 0, %s204
      %s207 = sphi 0, %s206
      %s221 = sphi 0, %s207
      %s225 = sphi 0, %s225
      %s227 = sphi 0, %s225
      %s228 = sphi 0, %s227
      %s242 = sphi 0, %s228
      %s250 = sphi 0, %s252
      %s253 = sphi 0, %s250
      %s254 = sphi 0, %s253
      %s270 = sphi 0, %s254
      %s278 = sphi 0, %s280
      %s281 = sphi 0, %s278
      %s282 = sphi 0, %s281
      %s298 = sphi 0, %s282
    $region4: #{tpu_custom_call.1} parent=1 // loop_header_branch
      %26 = sbr.rel (%p24) target = $region8
    $region5: #{tpu_custom_call.1} parent=1 // loop_body
      %s28 = ssub.s32 %s23, 1
      %s29 = ssub.s32 %s23, 2
      %s36 = sadd.s32 1, %s31
      %p37 = scmp.ge.s32.totalorder %s36, 1
      %s38 = scalar_select %p37, 0, %s36
      %s39 = sadd.s32 1, %s30
      %s40 = scalar_select %p37, %s39, %s30
      %p41 = scmp.ge.s32.totalorder %s40, 2
      %s42 = scalar_select %p41, 0, %s40
      %s43 = ssub.s32 %s30, %s42
      %s44 = ssub.s32 %s31, %s38
      %s45 = sor.u32 %s43, %s44
      %p46 = scmp.eq.s32.totalorder %s45, 0
      %s48 = sadd.s32 %s47, 1
      %s49 = scalar_select %p46, %s47, %s48
      %p52 = pneg %p46
      %p53 = scmp.eq.s32.totalorder %s23, 1
      %p54 = por %p52, %p53
      %p55 = scmp.ne.s32.totalorder %s47, %s50
      %p56 = scmp.eq.s32.totalorder %s23, 0
      %p57 = por %p55, %p56
      %p58 = scmp.ne.s32.totalorder %s47, %s50
      %p59 = scmp.eq.s32.totalorder %s28, 1
      %p60 = por %p58, %p59
      %p61 = scmp.ne.s32.totalorder %s50, %s51
      %p62 = scmp.eq.s32.totalorder %s28, 0
      %p63 = por %p61, %p62
      %p64 = scmp.ne.s32.totalorder %s50, %s51
      %p65 = scmp.eq.s32.totalorder %s29, 1
      %p66 = por %p64, %p65
      %p68 = scmp.ne.s32.totalorder %s51, %s67
      %p69 = scmp.eq.s32.totalorder %s29, 0
      %p70 = por %p68, %p69
      %s71 = ssub.s32 %s30, %s42
      %s72 = ssub.s32 %s31, %s38
      %s73 = sor.u32 %s71, %s72
      %p74 = scmp.eq.s32.totalorder %s73, 0
      %s76 = sadd.s32 %s75, 1
      %s77 = scalar_select %p74, %s75, %s76
      %p80 = pneg %p74
      %p81 = scmp.eq.s32.totalorder %s23, 1
      %p82 = por %p80, %p81
      %p83 = scmp.ne.s32.totalorder %s75, %s78
      %p84 = scmp.eq.s32.totalorder %s23, 0
      %p85 = por %p83, %p84
      %p86 = scmp.ne.s32.totalorder %s75, %s78
      %p87 = scmp.eq.s32.totalorder %s28, 1
      %p88 = por %p86, %p87
      %p89 = scmp.ne.s32.totalorder %s78, %s79
      %p90 = scmp.eq.s32.totalorder %s28, 0
      %p91 = por %p89, %p90
      %p92 = scmp.ne.s32.totalorder %s78, %s79
      %p93 = scmp.eq.s32.totalorder %s29, 1
      %p94 = por %p92, %p93
      %p96 = scmp.ne.s32.totalorder %s79, %s95
      %p97 = scmp.eq.s32.totalorder %s29, 0
      %p98 = por %p96, %p97
      %s100 = sadd.s32 %s99, 1
      %p103 = scmp.eq.s32.totalorder %s23, 1
      %p104 = scmp.ne.s32.totalorder %s99, %s101
      %p105 = scmp.eq.s32.totalorder %s23, 0
      %p106 = por %p104, %p105
      %p107 = scmp.ne.s32.totalorder %s99, %s101
      %p108 = scmp.eq.s32.totalorder %s28, 1
      %p109 = por %p107, %p108
      %p110 = scmp.ne.s32.totalorder %s101, %s102
      %p111 = scmp.eq.s32.totalorder %s28, 0
      %p112 = por %p110, %p111
      %p113 = scmp.ne.s32.totalorder %s101, %s102
      %p114 = scmp.eq.s32.totalorder %s29, 1
      %p115 = por %p113, %p114
      %p117 = scmp.ne.s32.totalorder %s102, %s116
      %p118 = scmp.eq.s32.totalorder %s29, 0
      %p119 = por %p117, %p118
      %s121 = sadd.s32 %s120, 1
      %p124 = scmp.eq.s32.totalorder %s23, 1
      %p125 = scmp.ne.s32.totalorder %s120, %s122
      %p126 = scmp.eq.s32.totalorder %s23, 0
      %p127 = por %p125, %p126
      %p128 = scmp.ne.s32.totalorder %s120, %s122
      %p129 = scmp.eq.s32.totalorder %s28, 1
      %p130 = por %p128, %p129
      %p131 = scmp.ne.s32.totalorder %s122, %s123
      %p132 = scmp.eq.s32.totalorder %s28, 0
      %p133 = por %p131, %p132
      %p134 = scmp.ne.s32.totalorder %s122, %s123
      %p135 = scmp.eq.s32.totalorder %s29, 1
      %p136 = por %p134, %p135
      %p138 = scmp.ne.s32.totalorder %s123, %s137
      %p139 = scmp.eq.s32.totalorder %s29, 0
      %p140 = por %p138, %p139
      %s142 = sadd.s32 %s141, 1
      %p145 = scmp.eq.s32.totalorder %s23, 1
      %p146 = scmp.ne.s32.totalorder %s141, %s143
      %p147 = scmp.eq.s32.totalorder %s23, 0
      %p148 = por %p146, %p147
      %p149 = scmp.ne.s32.totalorder %s141, %s143
      %p150 = scmp.eq.s32.totalorder %s28, 1
      %p151 = por %p149, %p150
      %p152 = scmp.ne.s32.totalorder %s143, %s144
      %p153 = scmp.eq.s32.totalorder %s28, 0
      %p154 = por %p152, %p153
      %p155 = scmp.ne.s32.totalorder %s143, %s144
      %p156 = scmp.eq.s32.totalorder %s29, 1
      %p157 = por %p155, %p156
      %p159 = scmp.ne.s32.totalorder %s144, %s158
      %p160 = scmp.eq.s32.totalorder %s29, 0
      %p161 = por %p159, %p160
      %s163 = sadd.s32 %s162, 1
      %p166 = scmp.eq.s32.totalorder %s23, 1
      %p167 = scmp.ne.s32.totalorder %s162, %s164
      %p168 = scmp.eq.s32.totalorder %s23, 0
      %p169 = por %p167, %p168
      %p170 = scmp.ne.s32.totalorder %s162, %s164
      %p171 = scmp.eq.s32.totalorder %s28, 1
      %p172 = por %p170, %p171
      %p173 = scmp.ne.s32.totalorder %s164, %s165
      %p174 = scmp.eq.s32.totalorder %s28, 0
      %p175 = por %p173, %p174
      %p176 = scmp.ne.s32.totalorder %s164, %s165
      %p177 = scmp.eq.s32.totalorder %s29, 1
      %p178 = por %p176, %p177
      %p180 = scmp.ne.s32.totalorder %s165, %s179
      %p181 = scmp.eq.s32.totalorder %s29, 0
      %p182 = por %p180, %p181
      %s184 = sadd.s32 %s183, 1
      %p187 = scmp.eq.s32.totalorder %s23, 1
      %p188 = scmp.ne.s32.totalorder %s183, %s185
      %p189 = scmp.eq.s32.totalorder %s23, 0
      %p190 = por %p188, %p189
      %p191 = scmp.ne.s32.totalorder %s183, %s185
      %p192 = scmp.eq.s32.totalorder %s28, 1
      %p193 = por %p191, %p192
      %p194 = scmp.ne.s32.totalorder %s185, %s186
      %p195 = scmp.eq.s32.totalorder %s28, 0
      %p196 = por %p194, %p195
      %p197 = scmp.ne.s32.totalorder %s185, %s186
      %p198 = scmp.eq.s32.totalorder %s29, 1
      %p199 = por %p197, %p198
      %p201 = scmp.ne.s32.totalorder %s186, %s200
      %p202 = scmp.eq.s32.totalorder %s29, 0
      %p203 = por %p201, %p202
      %s205 = sadd.s32 %s204, 1
      %p208 = scmp.eq.s32.totalorder %s23, 1
      %p209 = scmp.ne.s32.totalorder %s204, %s206
      %p210 = scmp.eq.s32.totalorder %s23, 0
      %p211 = por %p209, %p210
      %p212 = scmp.ne.s32.totalorder %s204, %s206
      %p213 = scmp.eq.s32.totalorder %s28, 1
      %p214 = por %p212, %p213
      %p215 = scmp.ne.s32.totalorder %s206, %s207
      %p216 = scmp.eq.s32.totalorder %s28, 0
      %p217 = por %p215, %p216
      %p218 = scmp.ne.s32.totalorder %s206, %s207
      %p219 = scmp.eq.s32.totalorder %s29, 1
      %p220 = por %p218, %p219
      %p222 = scmp.ne.s32.totalorder %s207, %s221
      %p223 = scmp.eq.s32.totalorder %s29, 0
      %p224 = por %p222, %p223
      %s226 = sadd.s32 %s225, 1
      %p229 = scmp.eq.s32.totalorder %s23, 1
      %p230 = scmp.ne.s32.totalorder %s225, %s227
      %p231 = scmp.eq.s32.totalorder %s23, 0
      %p232 = por %p230, %p231
      %p233 = scmp.ne.s32.totalorder %s225, %s227
      %p234 = scmp.eq.s32.totalorder %s28, 1
      %p235 = por %p233, %p234
      %p236 = scmp.ne.s32.totalorder %s227, %s228
      %p237 = scmp.eq.s32.totalorder %s28, 0
      %p238 = por %p236, %p237
      %p239 = scmp.ne.s32.totalorder %s227, %s228
      %p240 = scmp.eq.s32.totalorder %s29, 1
      %p241 = por %p239, %p240
      %p243 = scmp.ne.s32.totalorder %s228, %s242
      %p244 = scmp.eq.s32.totalorder %s29, 0
      %p245 = por %p243, %p244
      %s246 = ssub.s32 %s30, %s42
      %s247 = ssub.s32 %s31, %s38
      %s248 = sor.u32 %s246, %s247
      %p249 = scmp.eq.s32.totalorder %s248, 0
      %s251 = sadd.s32 %s250, 1
      %s252 = scalar_select %p249, %s250, %s251
      %p255 = pneg %p249
      %p256 = scmp.eq.s32.totalorder %s23, 1
      %p257 = por %p255, %p256
      %p258 = scmp.ne.s32.totalorder %s250, %s253
      %p259 = scmp.eq.s32.totalorder %s23, 0
      %p260 = por %p258, %p259
      %p261 = scmp.ne.s32.totalorder %s250, %s253
      %p262 = scmp.eq.s32.totalorder %s28, 1
      %p263 = por %p261, %p262
      %p264 = scmp.ne.s32.totalorder %s253, %s254
      %p265 = scmp.eq.s32.totalorder %s28, 0
      %p266 = por %p264, %p265
      %p267 = scmp.ne.s32.totalorder %s253, %s254
      %p268 = scmp.eq.s32.totalorder %s29, 1
      %p269 = por %p267, %p268
      %p271 = scmp.ne.s32.totalorder %s254, %s270
      %p272 = scmp.eq.s32.totalorder %s29, 0
      %p273 = por %p271, %p272
      %s274 = ssub.s32 %s30, %s42
      %s275 = ssub.s32 %s31, %s38
      %s276 = sor.u32 %s274, %s275
      %p277 = scmp.eq.s32.totalorder %s276, 0
      %s279 = sadd.s32 %s278, 1
      %s280 = scalar_select %p277, %s278, %s279
      %p283 = pneg %p277
      %p284 = scmp.eq.s32.totalorder %s23, 1
      %p285 = por %p283, %p284
      %p286 = scmp.ne.s32.totalorder %s278, %s281
      %p287 = scmp.eq.s32.totalorder %s23, 0
      %p288 = por %p286, %p287
      %p289 = scmp.ne.s32.totalorder %s278, %s281
      %p290 = scmp.eq.s32.totalorder %s28, 1
      %p291 = por %p289, %p290
      %p292 = scmp.ne.s32.totalorder %s281, %s282
      %p293 = scmp.eq.s32.totalorder %s28, 0
      %p294 = por %p292, %p293
      %p295 = scmp.ne.s32.totalorder %s281, %s282
      %p296 = scmp.eq.s32.totalorder %s29, 1
      %p297 = por %p295, %p296
      %p299 = scmp.ne.s32.totalorder %s282, %s298
      %p300 = scmp.eq.s32.totalorder %s29, 0
      %p301 = por %p299, %p300
      %p302 = scmp.le.s32.totalorder 1, %s23
      %p303 = scmp.lt.s32.totalorder %s23, 3
      %p304 = pnand %p302, %p303
      %p305 = pneg %p304
      // Predicated region
      $region9: #{tpu_custom_call.1} parent=5 // pred_check
        _
      $region10: #{tpu_custom_call.1} parent=5 // pred_check_branch
        %307 = sbr.rel (%p304) target = $region12
      $region11: #{tpu_custom_call.1} parent=5 // pred_region
        %s308 = ssub.s32 %s23, 1
        // Predicated region
        $region13: #{tpu_custom_call.1} parent=11 // pred_check
          %p309 = pneg %p112
        $region14: #{tpu_custom_call.1} parent=11 // pred_check_branch
          %311 = sbr.rel (%p309) target = $region16
        $region15: #{tpu_custom_call.1} parent=11 // pred_region
          _
        $region16: #{tpu_custom_call.1} parent=11 // pred_fallthru
          _
        // Predicated region
        $region17: #{tpu_custom_call.1} parent=11 // pred_check
          %p312 = pneg %p133
        $region18: #{tpu_custom_call.1} parent=11 // pred_check_branch
          %314 = sbr.rel (%p312) target = $region20
        $region19: #{tpu_custom_call.1} parent=11 // pred_region
          _
        $region20: #{tpu_custom_call.1} parent=11 // pred_fallthru
          _
        // Predicated region
        $region21: #{tpu_custom_call.1} parent=11 // pred_check
          %p315 = pneg %p154
        $region22: #{tpu_custom_call.1} parent=11 // pred_check_branch
          %317 = sbr.rel (%p315) target = $region24
        $region23: #{tpu_custom_call.1} parent=11 // pred_region
          _
        $region24: #{tpu_custom_call.1} parent=11 // pred_fallthru
          _
        // Predicated region
        $region25: #{tpu_custom_call.1} parent=11 // pred_check
          %p318 = pneg %p175
        $region26: #{tpu_custom_call.1} parent=11 // pred_check_branch
          %320 = sbr.rel (%p318) target = $region28
        $region27: #{tpu_custom_call.1} parent=11 // pred_region
          _
        $region28: #{tpu_custom_call.1} parent=11 // pred_fallthru
          _
        // Predicated region
        $region29: #{tpu_custom_call.1} parent=11 // pred_check
          %p321 = pneg %p196
        $region30: #{tpu_custom_call.1} parent=11 // pred_check_branch
          %323 = sbr.rel (%p321) target = $region32
        $region31: #{tpu_custom_call.1} parent=11 // pred_region
          _
        $region32: #{tpu_custom_call.1} parent=11 // pred_fallthru
          _
        // Predicated region
        $region33: #{tpu_custom_call.1} parent=11 // pred_check
          %p324 = pneg %p217
        $region34: #{tpu_custom_call.1} parent=11 // pred_check_branch
          %326 = sbr.rel (%p324) target = $region36
        $region35: #{tpu_custom_call.1} parent=11 // pred_region
          _
        $region36: #{tpu_custom_call.1} parent=11 // pred_fallthru
          _
        // Predicated region
        $region37: #{tpu_custom_call.1} parent=11 // pred_check
          %p327 = pneg %p238
        $region38: #{tpu_custom_call.1} parent=11 // pred_check_branch
          %329 = sbr.rel (%p327) target = $region40
        $region39: #{tpu_custom_call.1} parent=11 // pred_region
          _
        $region40: #{tpu_custom_call.1} parent=11 // pred_fallthru
          _
      $region12: #{tpu_custom_call.1} parent=5 // pred_fallthru
        _
      %p330 = scmp.lt.s32.totalorder %s23, 2
      // Predicated region
      $region41: #{tpu_custom_call.1} parent=5 // pred_check
        %p331 = pneg %p330
      $region42: #{tpu_custom_call.1} parent=5 // pred_check_branch
        %333 = sbr.rel (%p331) target = $region44
      $region43: #{tpu_custom_call.1} parent=5 // pred_region
        // Predicated region
        $region45: #{tpu_custom_call.1} parent=43 // pred_check
          %p334 = pneg %p57
        $region46: #{tpu_custom_call.1} parent=43 // pred_check_branch
          %336 = sbr.rel (%p334) target = $region48
        $region47: #{tpu_custom_call.1} parent=43 // pred_region
          %s337 = smul.u32 2, %s31
          %p338 = scmp.lt.s32.totalorder %s30, 1
          %s339 = scalar_select %p338, %s30, 1
          %p340 = scmp.lt.s32.totalorder %s337, 1
          %s341 = scalar_select %p340, %s337, 1
          %s342 = smul.addr %s339, 2
          %s343 = sadd.s32 %s341, %s342
          %s344 = smul.addr %s343, 4
          %s345 = scalar_lea.vmem %s0, %s344
          %s346 = smul.u32 2, %s31
        $region48: #{tpu_custom_call.1} parent=43 // pred_fallthru
          _
        // Predicated region
        $region49: #{tpu_custom_call.1} parent=43 // pred_check
          %p347 = pneg %p85
        $region50: #{tpu_custom_call.1} parent=43 // pred_check_branch
          %349 = sbr.rel (%p347) target = $region52
        $region51: #{tpu_custom_call.1} parent=43 // pred_region
          %s350 = smul.u32 2, %s31
          %p351 = scmp.lt.s32.totalorder %s30, 1
          %s352 = scalar_select %p351, %s30, 1
          %p353 = scmp.lt.s32.totalorder %s350, 1
          %s354 = scalar_select %p353, %s350, 1
          %s355 = smul.addr %s352, 2
          %s356 = sadd.s32 %s354, %s355
          %s357 = smul.addr %s356, 4
          %s358 = scalar_lea.vmem %s1, %s357
          %s359 = smul.u32 2, %s31
        $region52: #{tpu_custom_call.1} parent=43 // pred_fallthru
          _
      $region44: #{tpu_custom_call.1} parent=5 // pred_fallthru
        _
      %p360 = scmp.le.s32.totalorder 1, %s23
      %p361 = scmp.lt.s32.totalorder %s23, 3
      %p362 = pnand %p360, %p361
      %p363 = pneg %p362
      // Predicated region
      $region53: #{tpu_custom_call.1} parent=5 // pred_check
        _
      $region54: #{tpu_custom_call.1} parent=5 // pred_check_branch
        %365 = sbr.rel (%p362) target = $region56
      $region55: #{tpu_custom_call.1} parent=5 // pred_region
        %s366 = ssub.s32 %s23, 1
        %s367 = smul.u32 2, %s33
        %p368 = scmp.lt.s32.totalorder %s32, 1
        %s369 = scalar_select %p368, %s32, 1
        %p370 = scmp.lt.s32.totalorder %s367, 1
        %s371 = scalar_select %p370, %s367, 1
        %s372 = smul.addr %s369, 2
        %s373 = sadd.s32 %s371, %s372
        %s374 = smul.addr %s373, 4
        %s375 = scalar_lea.vmem %s0, %s374
        %p376 = pneg %p63
        %p377 = pneg %p60
        %s378 = smul.u32 2, %s33
        %p379 = scmp.lt.s32.totalorder %s32, 1
        %s380 = scalar_select %p379, %s32, 1
        %p381 = scmp.lt.s32.totalorder %s378, 1
        %s382 = scalar_select %p381, %s378, 1
        %s383 = smul.addr %s380, 2
        %s384 = sadd.s32 %s382, %s383
        %s385 = smul.addr %s384, 4
        %s386 = scalar_lea.vmem %s1, %s385
        %p387 = pneg %p91
        %p388 = pneg %p88
        %p389 = pneg %p112
        %p390 = pneg %p109
        %p391 = pneg %p133
        %p392 = pneg %p130
        %p393 = pneg %p154
        %p394 = pneg %p151
        %p395 = pneg %p175
        %p396 = pneg %p172
        %p397 = pneg %p196
        %p398 = pneg %p193
        %p399 = pneg %p217
        %p400 = pneg %p214
        %p401 = pneg %p238
        %p402 = pneg %p235
        %p403 = pneg %p266
        %p404 = pneg %p263
        %s405 = sand.u32 %s253, 1
        %s406 = scalar_lea.sflag [#allocation3], %s405
        %s407 = sand.u32 %s253, 1
        %s408 = smul.addr %s407, 16
        %s409 = scalar_lea.vmem [#allocation2], %s408
        %p410 = pneg %p294
        %p411 = pneg %p291
        %s412 = sand.u32 %s281, 1
        %s413 = scalar_lea.sflag [#allocation5], %s412
        %s414 = sand.u32 %s281, 1
        %s415 = smul.addr %s414, 16
        %s416 = scalar_lea.vmem [#allocation4], %s415
        %s417 = smul.u32 2, %s33
        %p418 = scmp.lt.s32.totalorder %s32, 1
        %s419 = scalar_select %p418, %s32, 1
        %p420 = scmp.lt.s32.totalorder %s417, 1
        %s421 = scalar_select %p420, %s417, 1
        %s422 = smul.addr %s419, 2
        %s423 = sadd.s32 %s421, %s422
        %s424 = smul.addr %s423, 4
        %s425 = scalar_lea.vmem %s0, %s424
        %s426 = smul.u32 2, %s33
        %s427 = smul.u32 2, %s33
        %p428 = scmp.lt.s32.totalorder %s32, 1
        %s429 = scalar_select %p428, %s32, 1
        %p430 = scmp.lt.s32.totalorder %s427, 1
        %s431 = scalar_select %p430, %s427, 1
        %s432 = smul.addr %s429, 2
        %s433 = sadd.s32 %s431, %s432
        %s434 = smul.addr %s433, 4
        %s435 = scalar_lea.vmem %s1, %s434
        %s436 = smul.u32 2, %s33
        %s437 = smul.u32 2, %s33
        %s438 = smul.u32 2, %s33
        %v439 = vld [vmem:[%s2] sm:$0xff]
        %v440 = vld [vmem:[%s2 + $0x8] sm:$0xff]
        %v441 = vld [vmem:[%s2 + $0x10] sm:$0xff]
        %v442 = vld [vmem:[%s2 + $0x18] sm:$0xff]
        %v443 = vld [vmem:[%s425] sm:$0xff]
        %v444 = vld [vmem:[%s3] sm:$0xff]
        %v445 = vld [vmem:[%s3 + $0x8] sm:$0xff]
        %v446 = vld [vmem:[%s3 + $0x10] sm:$0xff]
        %v447 = vld [vmem:[%s3 + $0x18] sm:$0xff]
        %v448 = vld [vmem:[%s435] sm:$0xff]
        %v450 = vcombine.high %v448, %v448
        %vm451 = vcmask 31744
        %v453 = vsel %vm451, %v444, 0
        %v456 = vsel %vm451, %v445, 0
        %v459 = vsel %vm451, %v446, 0
        %v462 = vsel %vm451, %v447, 0
        %vm464 = vcmask 1043456
        %v465 = vsel %vm464, %v448, 0
        %v467 = vsel %vm464, %v450, 0
        %469 = vmatprep.subr.mxu0 %v467
        %470 = vmatpush1.msra.mxu0 %v465
        %471 = vmatprep.subr.mxu0 0.0
        %472 = vmatpush1.msra.mxu0 0.0
        %473 = vmatprep.subr.mxu0 0.0
        %474 = vmatpush1.msra.mxu0 0.0
        %475 = vmatprep.subr.mxu0 0.0
        %476 = vmatpush1.msra.mxu0 0.0
        %477 = vmatprep.subr.mxu0 0.0
        %478 = vmatpush1.msra.mxu0 0.0
        %479 = vmatprep.subr.mxu0 0.0
        %480 = vmatpush1.msra.mxu0 0.0
        %481 = vmatprep.subr.mxu0 0.0
        %482 = vmatpush1.msra.mxu0 0.0
        %483 = vmatprep.subr.mxu0 0.0
        %484 = vmatpush1.msra.mxu0 0.0
        %485 = vmatprep.subr.mxu0 0.0
        %486 = vmatpush1.msra.mxu0 0.0
        %487 = vmatprep.subr.mxu0 0.0
        %488 = vmatpush1.msra.mxu0 0.0
        %489 = vmatprep.subr.mxu0 0.0
        %490 = vmatpush1.msra.mxu0 0.0
        %491 = vmatprep.subr.mxu0 0.0
        %492 = vmatpush1.msra.mxu0 0.0
        %493 = vmatprep.subr.mxu0 0.0
        %494 = vmatpush1.msra.mxu0 0.0
        %495 = vmatprep.subr.mxu0 0.0
        %496 = vmatpush1.msra.mxu0 0.0
        %497 = vmatprep.subr.mxu0 0.0
        %498 = vmatpush1.msra.mxu0 0.0
        %499 = vmatprep.subr.mxu0 0.0
        %500 = vmatpush1.msra.mxu0 0.0
        %501 = vmatprep.subr.mxu0 0.0
        %502 = vmatpush1.msra.mxu0 0.0
        %503 = vmatprep.subr.mxu0 0.0
        %504 = vmatpush1.msra.mxu0 0.0
        %505 = vmatprep.subr.mxu0 0.0
        %506 = vmatpush1.msra.mxu0 0.0
        %507 = vmatprep.subr.mxu0 0.0
        %508 = vmatpush1.msra.mxu0 0.0
        %509 = vmatprep.subr.mxu0 0.0
        %510 = vmatpush1.msra.mxu0 0.0
        %511 = vmatprep.subr.mxu0 0.0
        %512 = vmatpush1.msra.mxu0 0.0
        %513 = vmatprep.subr.mxu0 0.0
        %514 = vmatpush1.msra.mxu0 0.0
        %515 = vmatprep.subr.mxu0 0.0
        %516 = vmatpush1.msra.mxu0 0.0
        %517 = vmatprep.subr.mxu0 0.0
        %518 = vmatpush1.msra.mxu0 0.0
        %519 = vmatprep.subr.mxu0 0.0
        %520 = vmatpush1.msra.mxu0 0.0
        %521 = vmatprep.subr.mxu0 0.0
        %522 = vmatpush1.msra.mxu0 0.0
        %523 = vmatprep.subr.mxu0 0.0
        %524 = vmatpush1.msra.mxu0 0.0
        %525 = vmatprep.subr.mxu0 0.0
        %526 = vmatpush1.msra.mxu0 0.0
        %527 = vmatprep.subr.mxu0 0.0
        %528 = vmatpush1.msra.mxu0 0.0
        %529 = vmatprep.subr.mxu0 0.0
        %530 = vmatpush1.msra.mxu0 0.0
        %531 = vmatprep.subr.mxu0 0.0
        %532 = vmatpush1.msra.mxu0 0.0
        %533 = vmatprep.mubr.f32.mxu0 0.0
        %534 = vmatmul.mubr.f32.gmra.mrb[0].mxu0 %v453
        %v535 = vpop.f32.mrb[0].mxu0
        %v536 = vadd.f32 0.0, %v535
        %v537 = vpop.f32.mrb[0].mxu0
        %v538 = vadd.f32 0.0, %v537
        %539 = vmatprep.mubr.f32.mxu0 0.0
        %540 = vmatmul.mubr.f32.gmra.mrb[0].mxu0 %v456
        %v541 = vpop.f32.mrb[0].mxu0
        %v542 = vadd.f32 0.0, %v541
        %v543 = vpop.f32.mrb[0].mxu0
        %v544 = vadd.f32 0.0, %v543
        %545 = vmatprep.mubr.f32.mxu0 0.0
        %546 = vmatmul.mubr.f32.gmra.mrb[0].mxu0 %v459
        %v547 = vpop.f32.mrb[0].mxu0
        %v548 = vadd.f32 0.0, %v547
        %v549 = vpop.f32.mrb[0].mxu0
        %v550 = vadd.f32 0.0, %v549
        %551 = vmatprep.mubr.f32.mxu0 0.0
        %552 = vmatmul.mubr.f32.gmra.mrb[0].mxu0 %v462
        %v553 = vpop.f32.mrb[0].mxu0
        %v554 = vadd.f32 0.0, %v553
        %v555 = vpop.f32.mrb[0].mxu0
        %v556 = vadd.f32 0.0, %v555
        %557 = vdwg.mxu0
        %v559 = vcombine.high %v443, %v443
        %v561 = vsel %vm451, %v439, 0
        %v564 = vsel %vm451, %v440, 0
        %v567 = vsel %vm451, %v441, 0
        %v570 = vsel %vm451, %v442, 0
        %v572 = vsel %vm464, %v443, 0
        %v574 = vsel %vm464, %v559, 0
        %576 = vmatprep.subr.mxu0 %v574
        %577 = vmatpush1.msra.mxu0 %v572
        %578 = vmatprep.subr.mxu0 0.0
        %579 = vmatpush1.msra.mxu0 0.0
        %580 = vmatprep.subr.mxu0 0.0
        %581 = vmatpush1.msra.mxu0 0.0
        %582 = vmatprep.subr.mxu0 0.0
        %583 = vmatpush1.msra.mxu0 0.0
        %584 = vmatprep.subr.mxu0 0.0
        %585 = vmatpush1.msra.mxu0 0.0
        %586 = vmatprep.subr.mxu0 0.0
        %587 = vmatpush1.msra.mxu0 0.0
        %588 = vmatprep.subr.mxu0 0.0
        %589 = vmatpush1.msra.mxu0 0.0
        %590 = vmatprep.subr.mxu0 0.0
        %591 = vmatpush1.msra.mxu0 0.0
        %592 = vmatprep.subr.mxu0 0.0
        %593 = vmatpush1.msra.mxu0 0.0
        %594 = vmatprep.subr.mxu0 0.0
        %595 = vmatpush1.msra.mxu0 0.0
        %596 = vmatprep.subr.mxu0 0.0
        %597 = vmatpush1.msra.mxu0 0.0
        %598 = vmatprep.subr.mxu0 0.0
        %599 = vmatpush1.msra.mxu0 0.0
        %600 = vmatprep.subr.mxu0 0.0
        %601 = vmatpush1.msra.mxu0 0.0
        %602 = vmatprep.subr.mxu0 0.0
        %603 = vmatpush1.msra.mxu0 0.0
        %604 = vmatprep.subr.mxu0 0.0
        %605 = vmatpush1.msra.mxu0 0.0
        %606 = vmatprep.subr.mxu0 0.0
        %607 = vmatpush1.msra.mxu0 0.0
        %608 = vmatprep.subr.mxu0 0.0
        %609 = vmatpush1.msra.mxu0 0.0
        %610 = vmatprep.subr.mxu0 0.0
        %611 = vmatpush1.msra.mxu0 0.0
        %612 = vmatprep.subr.mxu0 0.0
        %613 = vmatpush1.msra.mxu0 0.0
        %614 = vmatprep.subr.mxu0 0.0
        %615 = vmatpush1.msra.mxu0 0.0
        %616 = vmatprep.subr.mxu0 0.0
        %617 = vmatpush1.msra.mxu0 0.0
        %618 = vmatprep.subr.mxu0 0.0
        %619 = vmatpush1.msra.mxu0 0.0
        %620 = vmatprep.subr.mxu0 0.0
        %621 = vmatpush1.msra.mxu0 0.0
        %622 = vmatprep.subr.mxu0 0.0
        %623 = vmatpush1.msra.mxu0 0.0
        %624 = vmatprep.subr.mxu0 0.0
        %625 = vmatpush1.msra.mxu0 0.0
        %626 = vmatprep.subr.mxu0 0.0
        %627 = vmatpush1.msra.mxu0 0.0
        %628 = vmatprep.subr.mxu0 0.0
        %629 = vmatpush1.msra.mxu0 0.0
        %630 = vmatprep.subr.mxu0 0.0
        %631 = vmatpush1.msra.mxu0 0.0
        %632 = vmatprep.subr.mxu0 0.0
        %633 = vmatpush1.msra.mxu0 0.0
        %634 = vmatprep.subr.mxu0 0.0
        %635 = vmatpush1.msra.mxu0 0.0
        %636 = vmatprep.subr.mxu0 0.0
        %637 = vmatpush1.msra.mxu0 0.0
        %638 = vmatprep.subr.mxu0 0.0
        %639 = vmatpush1.msra.mxu0 0.0
        %640 = vmatprep.mubr.f32.mxu0 0.0
        %641 = vmatmul.mubr.f32.gmra.mrb[0].mxu0 %v561
        %v642 = vpop.f32.mrb[0].mxu0
        %v643 = vadd.f32 %v536, %v642
        %v644 = vpop.f32.mrb[0].mxu0
        %v645 = vadd.f32 %v538, %v644
        %646 = vmatprep.mubr.f32.mxu0 0.0
        %647 = vmatmul.mubr.f32.gmra.mrb[0].mxu0 %v564
        %v648 = vpop.f32.mrb[0].mxu0
        %v649 = vadd.f32 %v542, %v648
        %v650 = vpop.f32.mrb[0].mxu0
        %v651 = vadd.f32 %v544, %v650
        %652 = vmatprep.mubr.f32.mxu0 0.0
        %653 = vmatmul.mubr.f32.gmra.mrb[0].mxu0 %v567
        %v654 = vpop.f32.mrb[0].mxu0
        %v655 = vadd.f32 %v548, %v654
        %v656 = vpop.f32.mrb[0].mxu0
        %v657 = vadd.f32 %v550, %v656
        %658 = vmatprep.mubr.f32.mxu0 0.0
        %659 = vmatmul.mubr.f32.gmra.mrb[0].mxu0 %v570
        %v660 = vpop.f32.mrb[0].mxu0
        %v661 = vadd.f32 %v554, %v660
        %v662 = vpop.f32.mrb[0].mxu0
        %v663 = vadd.f32 %v556, %v662
        %664 = vdwg.mxu0
        %v665 = vld [vmem:[%s4] sm:$0xff]
        %v666 = vld [vmem:[%s4 + $0x8] sm:$0xff]
        %v667 = vld [vmem:[%s4 + $0x10] sm:$0xff]
        %v668 = vld [vmem:[%s4 + $0x18] sm:$0xff]
        %670 = vset.pattern.permute.xlu0 0
        %671 = vperm.xlu0 %670, %v665
        %v672 = vpop.permute.xlu0 %671
        %675 = vset.pattern.permute.xlu0 0
        %676 = vperm.xlu0 %675, %v666
        %v677 = vpop.permute.xlu0 %676
        %680 = vset.pattern.permute.xlu0 0
        %681 = vperm.xlu0 %680, %v667
        %v682 = vpop.permute.xlu0 %681
        %685 = vset.pattern.permute.xlu0 0
        %686 = vperm.xlu0 %685, %v668
        %v687 = vpop.permute.xlu0 %686
        %v689 = vadd.f32 %v643, %v672
        %v690 = vadd.f32 %v645, %v672
        %v691 = vadd.f32 %v649, %v677
        %v692 = vadd.f32 %v651, %v677
        %v693 = vadd.f32 %v655, %v682
        %v694 = vadd.f32 %v657, %v682
        %v695 = vadd.f32 %v661, %v687
        %v696 = vadd.f32 %v663, %v687
        %v697 = vmax.f32 %v689, 0.0
        %v698 = vmax.f32 %v690, 0.0
        %v699 = vmax.f32 %v691, 0.0
        %v700 = vmax.f32 %v692, 0.0
        %v701 = vmax.f32 %v693, 0.0
        %v702 = vmax.f32 %v694, 0.0
        %v703 = vmax.f32 %v695, 0.0
        %v704 = vmax.f32 %v696, 0.0
        %v705 = vld [vmem:[%s5] sm:$0xff]
        %v706 = vld [vmem:[%s5 + $0x8] sm:$0xff]
        %v707 = vld [vmem:[%s5 + $0x10] sm:$0xff]
        %v708 = vld [vmem:[%s5 + $0x18] sm:$0xff]
        %v709 = vld [vmem:[%s6] sm:$0xff]
        %v710 = vld [vmem:[%s6 + $0x8] sm:$0xff]
        %v711 = vld [vmem:[%s6 + $0x10] sm:$0xff]
        %v712 = vld [vmem:[%s6 + $0x18] sm:$0xff]
        %714 = vset.pattern.permute.xlu0 0
        %715 = vperm.xlu0 %714, %v709
        %v716 = vpop.permute.xlu0 %715
        %719 = vset.pattern.permute.xlu0 0
        %720 = vperm.xlu0 %719, %v710
        %v721 = vpop.permute.xlu0 %720
        %724 = vset.pattern.permute.xlu0 0
        %725 = vperm.xlu0 %724, %v711
        %v726 = vpop.permute.xlu0 %725
        %729 = vset.pattern.permute.xlu0 0
        %730 = vperm.xlu0 %729, %v712
        %v731 = vpop.permute.xlu0 %730
        %vm733 = vcmask 261120
        %v735 = vsel %vm733, %v705, 0
        %v738 = vsel %vm733, %v706, 0
        %v741 = vsel %vm733, %v707, 0
        %v744 = vsel %vm733, %v708, 0
        %746 = vmatprep.subr.mxu0 %v698
        %747 = vmatpush1.msra.mxu0 %v697
        %748 = vmatprep.subr.mxu0 %v700
        %749 = vmatpush1.msra.mxu0 %v699
        %750 = vmatprep.subr.mxu0 %v702
        %751 = vmatpush1.msra.mxu0 %v701
        %752 = vmatprep.subr.mxu0 %v704
        %753 = vmatpush1.msra.mxu0 %v703
        %754 = vmatprep.subr.mxu0 0.0
        %755 = vmatpush1.msra.mxu0 0.0
        %756 = vmatprep.subr.mxu0 0.0
        %757 = vmatpush1.msra.mxu0 0.0
        %758 = vmatprep.subr.mxu0 0.0
        %759 = vmatpush1.msra.mxu0 0.0
        %760 = vmatprep.subr.mxu0 0.0
        %761 = vmatpush1.msra.mxu0 0.0
        %762 = vmatprep.subr.mxu0 0.0
        %763 = vmatpush1.msra.mxu0 0.0
        %764 = vmatprep.subr.mxu0 0.0
        %765 = vmatpush1.msra.mxu0 0.0
        %766 = vmatprep.subr.mxu0 0.0
        %767 = vmatpush1.msra.mxu0 0.0
        %768 = vmatprep.subr.mxu0 0.0
        %769 = vmatpush1.msra.mxu0 0.0
        %770 = vmatprep.subr.mxu0 0.0
        %771 = vmatpush1.msra.mxu0 0.0
        %772 = vmatprep.subr.mxu0 0.0
        %773 = vmatpush1.msra.mxu0 0.0
        %774 = vmatprep.subr.mxu0 0.0
        %775 = vmatpush1.msra.mxu0 0.0
        %776 = vmatprep.subr.mxu0 0.0
        %777 = vmatpush1.msra.mxu0 0.0
        %778 = vmatprep.subr.mxu0 0.0
        %779 = vmatpush1.msra.mxu0 0.0
        %780 = vmatprep.subr.mxu0 0.0
        %781 = vmatpush1.msra.mxu0 0.0
        %782 = vmatprep.subr.mxu0 0.0
        %783 = vmatpush1.msra.mxu0 0.0
        %784 = vmatprep.subr.mxu0 0.0
        %785 = vmatpush1.msra.mxu0 0.0
        %786 = vmatprep.subr.mxu0 0.0
        %787 = vmatpush1.msra.mxu0 0.0
        %788 = vmatprep.subr.mxu0 0.0
        %789 = vmatpush1.msra.mxu0 0.0
        %790 = vmatprep.subr.mxu0 0.0
        %791 = vmatpush1.msra.mxu0 0.0
        %792 = vmatprep.subr.mxu0 0.0
        %793 = vmatpush1.msra.mxu0 0.0
        %794 = vmatprep.subr.mxu0 0.0
        %795 = vmatpush1.msra.mxu0 0.0
        %796 = vmatprep.subr.mxu0 0.0
        %797 = vmatpush1.msra.mxu0 0.0
        %798 = vmatprep.subr.mxu0 0.0
        %799 = vmatpush1.msra.mxu0 0.0
        %800 = vmatprep.subr.mxu0 0.0
        %801 = vmatpush1.msra.mxu0 0.0
        %802 = vmatprep.subr.mxu0 0.0
        %803 = vmatpush1.msra.mxu0 0.0
        %804 = vmatprep.subr.mxu0 0.0
        %805 = vmatpush1.msra.mxu0 0.0
        %806 = vmatprep.subr.mxu0 0.0
        %807 = vmatpush1.msra.mxu0 0.0
        %808 = vmatprep.subr.mxu0 0.0
        %809 = vmatpush1.msra.mxu0 0.0
        %810 = vmatprep.mubr.f32.mxu0 0.0
        %811 = vmatmul.mubr.f32.gmra.mrb[0].mxu0 %v735
        %v812 = vpop.f32.mrb[0].mxu0
        %v813 = vadd.f32 %v716, %v812
        %v814 = vpop.f32.mrb[0].mxu0
        %v815 = vadd.f32 %v716, %v814
        %816 = vmatprep.mubr.f32.mxu0 0.0
        %817 = vmatmul.mubr.f32.gmra.mrb[0].mxu0 %v738
        %v818 = vpop.f32.mrb[0].mxu0
        %v819 = vadd.f32 %v721, %v818
        %v820 = vpop.f32.mrb[0].mxu0
        %v821 = vadd.f32 %v721, %v820
        %822 = vmatprep.mubr.f32.mxu0 0.0
        %823 = vmatmul.mubr.f32.gmra.mrb[0].mxu0 %v741
        %v824 = vpop.f32.mrb[0].mxu0
        %v825 = vadd.f32 %v726, %v824
        %v826 = vpop.f32.mrb[0].mxu0
        %v827 = vadd.f32 %v726, %v826
        %828 = vmatprep.mubr.f32.mxu0 0.0
        %829 = vmatmul.mubr.f32.gmra.mrb[0].mxu0 %v744
        %v830 = vpop.f32.mrb[0].mxu0
        %v831 = vadd.f32 %v731, %v830
        %v832 = vpop.f32.mrb[0].mxu0
        %v833 = vadd.f32 %v731, %v832
        %834 = vdwg.mxu0
        %v835 = vmax.f32 %v813, 0.0
        %v836 = vmax.f32 %v815, 0.0
        %v837 = vmax.f32 %v819, 0.0
        %v838 = vmax.f32 %v821, 0.0
        %v839 = vmax.f32 %v825, 0.0
        %v840 = vmax.f32 %v827, 0.0
        %v841 = vmax.f32 %v831, 0.0
        %v842 = vmax.f32 %v833, 0.0
        %v843 = vld [vmem:[%s7] sm:$0xff]
        %v844 = vld [vmem:[%s7 + $0x8] sm:$0xff]
        %v845 = vld [vmem:[%s8] sm:$0xff]
        %v846 = vld [vmem:[%s8 + $0x8] sm:$0xff]
        %848 = vset.pattern.permute.xlu0 0
        %849 = vperm.xlu0 %848, %v845
        %v850 = vpop.permute.xlu0 %849
        %853 = vset.pattern.permute.xlu0 0
        %854 = vperm.xlu0 %853, %v846
        %v855 = vpop.permute.xlu0 %854
        %v858 = vsel %vm733, %v843, 0
        %v861 = vsel %vm733, %v844, 0
        %863 = vmatprep.subr.mxu0 %v836
        %864 = vmatpush1.msra.mxu0 %v835
        %865 = vmatprep.subr.mxu0 %v838
        %866 = vmatpush1.msra.mxu0 %v837
        %867 = vmatprep.subr.mxu0 %v840
        %868 = vmatpush1.msra.mxu0 %v839
        %869 = vmatprep.subr.mxu0 %v842
        %870 = vmatpush1.msra.mxu0 %v841
        %871 = vmatprep.subr.mxu0 0.0
        %872 = vmatpush1.msra.mxu0 0.0
        %873 = vmatprep.subr.mxu0 0.0
        %874 = vmatpush1.msra.mxu0 0.0
        %875 = vmatprep.subr.mxu0 0.0
        %876 = vmatpush1.msra.mxu0 0.0
        %877 = vmatprep.subr.mxu0 0.0
        %878 = vmatpush1.msra.mxu0 0.0
        %879 = vmatprep.subr.mxu0 0.0
        %880 = vmatpush1.msra.mxu0 0.0
        %881 = vmatprep.subr.mxu0 0.0
        %882 = vmatpush1.msra.mxu0 0.0
        %883 = vmatprep.subr.mxu0 0.0
        %884 = vmatpush1.msra.mxu0 0.0
        %885 = vmatprep.subr.mxu0 0.0
        %886 = vmatpush1.msra.mxu0 0.0
        %887 = vmatprep.subr.mxu0 0.0
        %888 = vmatpush1.msra.mxu0 0.0
        %889 = vmatprep.subr.mxu0 0.0
        %890 = vmatpush1.msra.mxu0 0.0
        %891 = vmatprep.subr.mxu0 0.0
        %892 = vmatpush1.msra.mxu0 0.0
        %893 = vmatprep.subr.mxu0 0.0
        %894 = vmatpush1.msra.mxu0 0.0
        %895 = vmatprep.subr.mxu0 0.0
        %896 = vmatpush1.msra.mxu0 0.0
        %897 = vmatprep.subr.mxu0 0.0
        %898 = vmatpush1.msra.mxu0 0.0
        %899 = vmatprep.subr.mxu0 0.0
        %900 = vmatpush1.msra.mxu0 0.0
        %901 = vmatprep.subr.mxu0 0.0
        %902 = vmatpush1.msra.mxu0 0.0
        %903 = vmatprep.subr.mxu0 0.0
        %904 = vmatpush1.msra.mxu0 0.0
        %905 = vmatprep.subr.mxu0 0.0
        %906 = vmatpush1.msra.mxu0 0.0
        %907 = vmatprep.subr.mxu0 0.0
        %908 = vmatpush1.msra.mxu0 0.0
        %909 = vmatprep.subr.mxu0 0.0
        %910 = vmatpush1.msra.mxu0 0.0
        %911 = vmatprep.subr.mxu0 0.0
        %912 = vmatpush1.msra.mxu0 0.0
        %913 = vmatprep.subr.mxu0 0.0
        %914 = vmatpush1.msra.mxu0 0.0
        %915 = vmatprep.subr.mxu0 0.0
        %916 = vmatpush1.msra.mxu0 0.0
        %917 = vmatprep.subr.mxu0 0.0
        %918 = vmatpush1.msra.mxu0 0.0
        %919 = vmatprep.subr.mxu0 0.0
        %920 = vmatpush1.msra.mxu0 0.0
        %921 = vmatprep.subr.mxu0 0.0
        %922 = vmatpush1.msra.mxu0 0.0
        %923 = vmatprep.subr.mxu0 0.0
        %924 = vmatpush1.msra.mxu0 0.0
        %925 = vmatprep.subr.mxu0 0.0
        %926 = vmatpush1.msra.mxu0 0.0
        %927 = vmatprep.mubr.f32.mxu0 0.0
        %928 = vmatmul.mubr.f32.gmra.mrb[0].mxu0 %v858
        %v929 = vpop.f32.mrb[0].mxu0
        %v930 = vadd.f32 %v850, %v929
        %v931 = vpop.f32.mrb[0].mxu0
        %v932 = vadd.f32 %v850, %v931
        %933 = vmatprep.mubr.f32.mxu0 0.0
        %934 = vmatmul.mubr.f32.gmra.mrb[0].mxu0 %v861
        %v935 = vpop.f32.mrb[0].mxu0
        %v936 = vadd.f32 %v855, %v935
        %v937 = vpop.f32.mrb[0].mxu0
        %v938 = vadd.f32 %v855, %v937
        %939 = vdwg.mxu0
        %940 = vst [vmem:[%s409] sm:$0xff] %v930
        %941 = vst [vmem:[%s409 + $0x8] sm:$0xff] %v932
        %942 = vst [vmem:[%s416] sm:$0xff] %v936
        %943 = vst [vmem:[%s416 + $0x8] sm:$0xff] %v938
        %s944 = sand.u32 %s253, 1
        %s945 = scalar_lea.sflag [#allocation3], %s944
        %s946 = sand.u32 %s253, 1
        %s947 = smul.addr %s946, 16
        %s948 = scalar_lea.vmem [#allocation2], %s947
        %s949 = sand.u32 %s281, 1
        %s950 = scalar_lea.sflag [#allocation5], %s949
        %s951 = sand.u32 %s281, 1
        %s952 = smul.addr %s951, 16
        %s953 = scalar_lea.vmem [#allocation4], %s952
        // Predicated region
        $region57: #{tpu_custom_call.1} parent=55 // pred_check
          %p954 = pneg %p263
        $region58: #{tpu_custom_call.1} parent=55 // pred_check_branch
          %956 = sbr.rel (%p954) target = $region60
        $region59: #{tpu_custom_call.1} parent=55 // pred_region
          %s957 = smul.u32 2, %s33
          %s959 = ssub.s32 256, 256
          %960 = vsyncadd %s945, %s959
          %s961 = smul.addr %s32, 2
          %s962 = sadd.s32 %s957, %s961
          %s963 = smul.addr %s962, 128
          %s964 = scalar_lea.hbm %s9, %s963
          %s966 = sshll.u32 %s948, 4
          %s967 = int_to_ptr.vmem [resolvable:$true] %s966
          %969 = dma.vmem_to_hbm [thread:$0]  %s967, 256, %s964, %s945
        $region60: #{tpu_custom_call.1} parent=55 // pred_fallthru
          _
        // Predicated region
        $region61: #{tpu_custom_call.1} parent=55 // pred_check
          %p970 = pneg %p291
        $region62: #{tpu_custom_call.1} parent=55 // pred_check_branch
          %972 = sbr.rel (%p970) target = $region64
        $region63: #{tpu_custom_call.1} parent=55 // pred_region
          %s973 = smul.u32 2, %s33
          %s975 = ssub.s32 256, 256
          %976 = vsyncadd %s950, %s975
          %s977 = smul.addr %s32, 2
          %s978 = sadd.s32 %s973, %s977
          %s979 = smul.addr %s978, 128
          %s980 = scalar_lea.hbm %s10, %s979
          %s982 = sshll.u32 %s953, 4
          %s983 = int_to_ptr.vmem [resolvable:$true] %s982
          %985 = dma.vmem_to_hbm [thread:$0]  %s983, 256, %s980, %s950
        $region64: #{tpu_custom_call.1} parent=55 // pred_fallthru
          _
      $region56: #{tpu_custom_call.1} parent=5 // pred_fallthru
        _
      %p986 = scmp.le.s32.totalorder 2, %s23
      // Predicated region
      $region65: #{tpu_custom_call.1} parent=5 // pred_check
        %p987 = pneg %p986
      $region66: #{tpu_custom_call.1} parent=5 // pred_check_branch
        %989 = sbr.rel (%p987) target = $region68
      $region67: #{tpu_custom_call.1} parent=5 // pred_region
        %s990 = ssub.s32 %s23, 2
        // Predicated region
        $region69: #{tpu_custom_call.1} parent=67 // pred_check
          %p991 = pneg %p269
        $region70: #{tpu_custom_call.1} parent=67 // pred_check_branch
          %993 = sbr.rel (%p991) target = $region72
        $region71: #{tpu_custom_call.1} parent=67 // pred_region
          %s994 = sand.u32 %s254, 1
          %s995 = scalar_lea.sflag [#allocation3], %s994
          %s996 = sand.u32 %s254, 1
          %s997 = smul.addr %s996, 16
          %s998 = scalar_lea.vmem [#allocation2], %s997
          %999 = dma.done %s995, 256
        $region72: #{tpu_custom_call.1} parent=67 // pred_fallthru
          _
        // Predicated region
        $region73: #{tpu_custom_call.1} parent=67 // pred_check
          %p1000 = pneg %p297
        $region74: #{tpu_custom_call.1} parent=67 // pred_check_branch
          %1002 = sbr.rel (%p1000) target = $region76
        $region75: #{tpu_custom_call.1} parent=67 // pred_region
          %s1003 = sand.u32 %s282, 1
          %s1004 = scalar_lea.sflag [#allocation5], %s1003
          %s1005 = sand.u32 %s282, 1
          %s1006 = smul.addr %s1005, 16
          %s1007 = scalar_lea.vmem [#allocation4], %s1006
          %1008 = dma.done %s1004, 256
        $region76: #{tpu_custom_call.1} parent=67 // pred_fallthru
          _
      $region68: #{tpu_custom_call.1} parent=5 // pred_fallthru
        _
    $region6: #{tpu_custom_call.1} parent=1 // loop_footer
      %s27 = sadd.s32 1, %s23
    $region7: #{tpu_custom_call.1} parent=1 // loop_footer_branch
      %22 = sbr.rel target = $region3
    $region8: #{tpu_custom_call.1} parent=1 // loop_exit
      _
    %1009 = vsyncpa [#allocation3], 1
    %s1010 = scalar_lea.sflag [#allocation3], 1
    %1011 = vsyncpa %s1010, 1
    %1012 = vsyncpa [#allocation5], 1
    %s1013 = scalar_lea.sflag [#allocation5], 1
    %1014 = vsyncpa %s1013, 1

</llo_original>
